<compile_context>
chip_gen: v7x
topology: tpu7x:2x2x1
jax: 0.10.0
libtpu: 0.0.40
codegen_flags: <defaults>
</compile_context>

<pallas_src>
import functools

import jax
import jax.numpy as jnp
from jax.experimental import pallas as pl
from jax.experimental.pallas import tpu as pltpu

_LANES = 128   # lane width of one accumulator slice
_GROUP = 8     # 128-lane sub-slices folded per fori_loop iteration


def _accumulate(x_ref, sum_ref, max_ref, *, n_sub, k, tile_hw, hw_total, masked):
    """Fold the current (1, C, tile_hw) tile into the (1, C, 128) accumulators
    using register-carried partials; one scratch load + store per grid step."""

    def fold(j, s, m):
        off = pl.multiple_of(j * _LANES, _LANES)
        v = x_ref[:, :, pl.ds(off, _LANES)].astype(jnp.float32)   # (1, C, 128)
        if masked:
            lane = jax.lax.broadcasted_iota(jnp.int32, v.shape, 2)
            valid = (k * tile_hw + j * _LANES + lane) < hw_total
            s = s + jnp.where(valid, v, 0.0)
            m = jnp.maximum(m, jnp.where(valid, v, -jnp.inf))
        else:
            s = s + v
            m = jnp.maximum(m, v)
        return s, m

    carry = (sum_ref[...], max_ref[...])
    n_groups, rem = divmod(n_sub, _GROUP)

    if n_groups > 0:
        def body(g, c):
            s, m = c
            base = g * _GROUP
            for i in range(_GROUP):
                s, m = fold(base + i, s, m)
            return s, m
        carry = jax.lax.fori_loop(0, n_groups, body, carry)

    s, m = carry
    for i in range(rem):                       # static leftover slices
        s, m = fold(n_groups * _GROUP + i, s, m)

    sum_ref[...] = s
    max_ref[...] = m


def _channel_attention_kernel(x_ref, w1_ref, w2_ref, o_ref, sum_ref, max_ref,
                              *, hw_total, tile_hw, need_mask):
    # x_ref:   (1, C, tile_hw)  current batch row / spatial chunk
    # w1_ref:  (C, C//r)        fc1.weight.T   (VMEM-resident)
    # w2_ref:  (C//r, C)        fc2.weight.T   (VMEM-resident)
    # o_ref:   (1, 1, C)        per-batch output (written only in epilogue)
    # sum/max: (1, C, 128)      f32 accumulators, persist across the HW axis
    k = pl.program_id(1)
    nk = pl.num_programs(1)
    n_sub = tile_hw // _LANES

    @pl.when(k == 0)
    def _init():
        sum_ref[...] = jnp.zeros(sum_ref.shape, sum_ref.dtype)
        max_ref[...] = jnp.full(max_ref.shape, -jnp.inf, max_ref.dtype)

    acc = functools.partial(_accumulate, x_ref, sum_ref, max_ref,
                            n_sub=n_sub, k=k, tile_hw=tile_hw, hw_total=hw_total)

    if need_mask:
        @pl.when(k != nk - 1)
        def _unmasked():
            acc(masked=False)

        @pl.when(k == nk - 1)
        def _masked_tail():
            acc(masked=True)
    else:
        acc(masked=False)

    @pl.when(k == nk - 1)
    def _epilogue():
        # One cross-lane reduce per batch row, then the tiny stacked FC + sigmoid.
        avg = jnp.sum(sum_ref[...], axis=-1) * (1.0 / hw_total)    # (1, C)
        mx = jnp.max(max_ref[...], axis=-1)                        # (1, C)
        pooled = jnp.concatenate([avg, mx], axis=0)                # (2, C)

        h = jnp.dot(pooled, w1_ref[...], preferred_element_type=jnp.float32)
        h = jnp.maximum(h, 0.0)                                    # ReLU
        z = jnp.dot(h, w2_ref[...], preferred_element_type=jnp.float32)   # (2, C)
        logits = z[0:1, :] + z[1:2, :]                             # fc(avg)+fc(max)
        res = jax.nn.sigmoid(logits).astype(o_ref.dtype)           # (1, C)
        o_ref[...] = res.reshape(o_ref.shape)


def _pick_tile_hw(c, hw, itemsize):
    """Lane tile: multiple of 128, ~6 MiB per (double-buffered) input buffer,
    dtype-aware, capped so the pipeline stays inside scoped VMEM on all gens."""
    target_bytes = 6 * 1024 * 1024
    lanes = target_bytes // max(c * itemsize, 1)
    lanes = max(_LANES, min(lanes, 32768))
    lanes = (lanes // _LANES) * _LANES
    hw_padded = pl.cdiv(hw, _LANES) * _LANES
    return min(lanes, hw_padded)


def channel_attention(x, w1_t, w2_t, *, tile_hw=None):
    """x: (B, C, H, W).  Returns sigmoid(fc(avg)+fc(max)) as (B, C, 1, 1)."""
    b, c, h, w = x.shape
    hw = h * w
    x_flat = x.reshape(b, c, hw)                 # free reshape, no transpose

    if tile_hw is None:
        tile_hw = _pick_tile_hw(c, hw, jnp.dtype(x.dtype).itemsize)
    if tile_hw % _LANES != 0:
        raise ValueError("tile_hw must be a multiple of 128")
    tile_hw = min(tile_hw, pl.cdiv(hw, _LANES) * _LANES)

    nk = pl.cdiv(hw, tile_hw)
    need_mask = (hw % tile_hw) != 0              # padded lanes only on last chunk

    kernel = functools.partial(
        _channel_attention_kernel,
        hw_total=hw, tile_hw=tile_hw, need_mask=need_mask)

    out = pl.pallas_call(
        kernel,
        out_shape=jax.ShapeDtypeStruct((b, 1, c), x.dtype),
        grid_spec=pltpu.PrefetchScalarGridSpec(
            num_scalar_prefetch=0,
            grid=(b, nk),                                       # B parallel, HW reduction
            in_specs=[
                pl.BlockSpec((1, c, tile_hw), lambda bi, k: (bi, 0, k)),
                pl.BlockSpec(w1_t.shape, lambda bi, k: (0, 0)),  # resident
                pl.BlockSpec(w2_t.shape, lambda bi, k: (0, 0)),  # resident
            ],
            out_specs=pl.BlockSpec((1, 1, c), lambda bi, k: (bi, 0, 0)),
            scratch_shapes=[
                pltpu.VMEM((1, c, _LANES), jnp.float32),        # running sum
                pltpu.VMEM((1, c, _LANES), jnp.float32),        # running max
            ],
        ),
        compiler_params=pltpu.CompilerParams(
            dimension_semantics=("parallel", "arbitrary"),
            vmem_limit_bytes=32 * 1024 * 1024),
    )(x_flat, w1_t, w2_t)

    return out.reshape(b, c, 1, 1)


def reference(x, w1_t, w2_t):
    b, c, _, _ = x.shape
    avg = jnp.mean(x, axis=(2, 3))
    mx = jnp.max(x, axis=(2, 3))

    def fc(v):
        return jnp.maximum(v @ w1_t, 0.0) @ w2_t

    return jax.nn.sigmoid(fc(avg) + fc(mx)).reshape(b, c, 1, 1)


if __name__ == "__main__":
    B, C, H, W = 2, 128, 16, 16
    reduction = 16
    hidden = C // reduction                      # 8

    key = jax.random.PRNGKey(0)
    kx, k1, k2, kx2, kx3 = jax.random.split(key, 5)

    x = jax.random.normal(kx, (B, C, H, W), dtype=jnp.float32)
    # PyTorch nn.Linear(in, out, bias=False).weight has shape (out, in); the
    # kernel consumes the transposed weights directly (deterministic init).
    w1_t = jax.random.normal(k1, (C, hidden), dtype=jnp.float32) * 0.1   # fc1.weight.T
    w2_t = jax.random.normal(k2, (hidden, C), dtype=jnp.float32) * 0.1   # fc2.weight.T

    out = channel_attention(x, w1_t, w2_t)
    jax.block_until_ready(out)
    assert out.shape == (B, C, 1, 1)
    assert jnp.allclose(out, reference(x, w1_t, w2_t), atol=2e-5, rtol=1e-5)

    # Multi-chunk pipeline + masked partial tail (HW = 299, tile = 128).
    x2 = jax.random.normal(kx2, (B, C, 23, 13), dtype=jnp.float32)
    out2 = channel_attention(x2, w1_t, w2_t, tile_hw=128)
    jax.block_until_ready(out2)
    assert jnp.allclose(out2, reference(x2, w1_t, w2_t), atol=2e-5, rtol=1e-5)

    # Larger spatial extent: exercises the register-carried fori_loop path
    # (tile_hw = 4096 -> 4 groups of 8 x 128-lane slices per grid step).
    x3 = jax.random.normal(kx3, (B, C, 64, 64), dtype=jnp.float32)
    out3 = channel_attention(x3, w1_t, w2_t)
    jax.block_until_ready(out3)
    assert jnp.allclose(out3, reference(x3, w1_t, w2_t), atol=2e-5, rtol=1e-5)

    print("KERNEL_OK")
</pallas_src>

<mosaic_0001>
module attributes {stable_mosaic.version = 11 : i64} {
  func.func @_channel_attention_kernel(%arg0: i32, %arg1: i32, %arg2: memref<1x128x256xf32, #tpu.memory_space<vmem>>, %arg3: memref<128x8xf32, #tpu.memory_space<vmem>>, %arg4: memref<8x128xf32, #tpu.memory_space<vmem>>, %arg5: memref<1x1x128xf32, #tpu.memory_space<vmem>>, %arg6: memref<1x128x128xf32, #tpu.memory_space<vmem>>, %arg7: memref<1x128x128xf32, #tpu.memory_space<vmem>>) attributes {dimension_semantics = [#tpu.dimension_semantics<parallel>, #tpu.dimension_semantics<arbitrary>], iteration_bounds = array<i64: 2, 1>, scalar_prefetch = 0 : i64, scratch_operands = 2 : i64, tpu.core_type = #tpu.core_type<tc>, window_params = [{transform_indices = @transform_0, window_bounds = array<i64: 1, 128, 256>}, {pipeline_mode = #tpu.pipeline_mode<synchronous>, transform_indices = @transform_1, window_bounds = array<i64: 128, 8>}, {pipeline_mode = #tpu.pipeline_mode<synchronous>, transform_indices = @transform_2, window_bounds = array<i64: 8, 128>}, {transform_indices = @transform_3, window_bounds = array<i64: 1, 1, 128>}]} {
    %c0_i32 = arith.constant 0 : i32
    %0 = arith.cmpi eq, %arg1, %c0_i32 : i32
    %1 = arith.extui %0 : i1 to i32
    %c0_i32_0 = arith.constant 0 : i32
    %2 = arith.cmpi ne, %1, %c0_i32_0 : i32
    scf.if %2 {
      %cst = arith.constant 0.000000e+00 : f32
      %20 = vector.broadcast %cst : f32 to vector<1x128x128xf32>
      %c0_19 = arith.constant 0 : index
      %c0_20 = arith.constant 0 : index
      %c0_21 = arith.constant 0 : index
      %21 = vector.load %arg6[%c0_19, %c0_20, %c0_21] : memref<1x128x128xf32, #tpu.memory_space<vmem>>, vector<1x128x128xf32>
      tpu.vector_store %arg6[%c0_19, %c0_20, %c0_21], %20 {strides = array<i32>} : memref<1x128x128xf32, #tpu.memory_space<vmem>>, vector<1x128x128xf32>,
      %cst_22 = arith.constant 0xFF800000 : f32
      %22 = vector.broadcast %cst_22 : f32 to vector<1x128x128xf32>
      %c0_23 = arith.constant 0 : index
      %c0_24 = arith.constant 0 : index
      %c0_25 = arith.constant 0 : index
      %23 = vector.load %arg7[%c0_23, %c0_24, %c0_25] : memref<1x128x128xf32, #tpu.memory_space<vmem>>, vector<1x128x128xf32>
      tpu.vector_store %arg7[%c0_23, %c0_24, %c0_25], %22 {strides = array<i32>} : memref<1x128x128xf32, #tpu.memory_space<vmem>>, vector<1x128x128xf32>,
    } else {
    }
    %c0 = arith.constant 0 : index
    %c0_1 = arith.constant 0 : index
    %c0_2 = arith.constant 0 : index
    %3 = vector.load %arg6[%c0, %c0_1, %c0_2] : memref<1x128x128xf32, #tpu.memory_space<vmem>>, vector<1x128x128xf32>
    %c0_3 = arith.constant 0 : index
    %c0_4 = arith.constant 0 : index
    %c0_5 = arith.constant 0 : index
    %4 = vector.load %arg7[%c0_3, %c0_4, %c0_5] : memref<1x128x128xf32, #tpu.memory_space<vmem>>, vector<1x128x128xf32>
    %c0_i32_6 = arith.constant 0 : i32
    %5 = tpu.assume_multiple %c0_i32_6, 128 : i32
    %c0_7 = arith.constant 0 : index
    %c0_8 = arith.constant 0 : index
    %6 = arith.index_cast %5 : i32 to index
    %7 = vector.load %arg2[%c0_7, %c0_8, %6] : memref<1x128x256xf32, #tpu.memory_space<vmem>>, vector<1x128x128xf32>
    %8 = arith.addf %3, %7 : vector<1x128x128xf32>
    %9 = arith.maximumf %4, %7 : vector<1x128x128xf32>
    %c128_i32 = arith.constant 128 : i32
    %10 = tpu.assume_multiple %c128_i32, 128 : i32
    %c0_9 = arith.constant 0 : index
    %c0_10 = arith.constant 0 : index
    %11 = arith.index_cast %10 : i32 to index
    %12 = vector.load %arg2[%c0_9, %c0_10, %11] : memref<1x128x256xf32, #tpu.memory_space<vmem>>, vector<1x128x128xf32>
    %13 = arith.addf %8, %12 : vector<1x128x128xf32>
    %14 = arith.maximumf %9, %12 : vector<1x128x128xf32>
    %c0_11 = arith.constant 0 : index
    %c0_12 = arith.constant 0 : index
    %c0_13 = arith.constant 0 : index
    %15 = vector.load %arg6[%c0_11, %c0_12, %c0_13] : memref<1x128x128xf32, #tpu.memory_space<vmem>>, vector<1x128x128xf32>
    tpu.vector_store %arg6[%c0_11, %c0_12, %c0_13], %13 {strides = array<i32>} : memref<1x128x128xf32, #tpu.memory_space<vmem>>, vector<1x128x128xf32>,
    %c0_14 = arith.constant 0 : index
    %c0_15 = arith.constant 0 : index
    %c0_16 = arith.constant 0 : index
    %16 = vector.load %arg7[%c0_14, %c0_15, %c0_16] : memref<1x128x128xf32, #tpu.memory_space<vmem>>, vector<1x128x128xf32>
    tpu.vector_store %arg7[%c0_14, %c0_15, %c0_16], %14 {strides = array<i32>} : memref<1x128x128xf32, #tpu.memory_space<vmem>>, vector<1x128x128xf32>,
    %c0_i32_17 = arith.constant 0 : i32
    %17 = arith.cmpi eq, %arg1, %c0_i32_17 : i32
    %18 = arith.extui %17 : i1 to i32
    %c0_i32_18 = arith.constant 0 : i32
    %19 = arith.cmpi ne, %18, %c0_i32_18 : i32
    scf.if %19 {
      %c0_19 = arith.constant 0 : index
      %c0_20 = arith.constant 0 : index
      %c0_21 = arith.constant 0 : index
      %20 = vector.load %arg6[%c0_19, %c0_20, %c0_21] : memref<1x128x128xf32, #tpu.memory_space<vmem>>, vector<1x128x128xf32>
      %cst = arith.constant dense<0.000000e+00> : vector<1x128xf32>
      %21 = vector.multi_reduction <add>, %20, %cst [2] : vector<1x128x128xf32> to vector<1x128xf32>
      %cst_22 = arith.constant 3.906250e-03 : f32
      %22 = vector.broadcast %cst_22 : f32 to vector<1x128xf32>
      %23 = arith.mulf %21, %22 : vector<1x128xf32>
      %c0_23 = arith.constant 0 : index
      %c0_24 = arith.constant 0 : index
      %c0_25 = arith.constant 0 : index
      %24 = vector.load %arg7[%c0_23, %c0_24, %c0_25] : memref<1x128x128xf32, #tpu.memory_space<vmem>>, vector<1x128x128xf32>
      %cst_26 = arith.constant dense<0xFF800000> : vector<1x128xf32>
      %25 = vector.multi_reduction <maximumf>, %24, %cst_26 [2] : vector<1x128x128xf32> to vector<1x128xf32>
      %26 = tpu.concatenate %23, %25 in 0 : vector<1x128xf32>, vector<1x128xf32> -> vector<2x128xf32>
      %c0_27 = arith.constant 0 : index
      %c0_28 = arith.constant 0 : index
      %27 = vector.load %arg3[%c0_27, %c0_28] : memref<128x8xf32, #tpu.memory_space<vmem>>, vector<128x8xf32>
      %cst_29 = arith.constant dense<0.000000e+00> : vector<2x8xf32>
      %28 = tpu.matmul %26, %27, %cst_29 {dimension_numbers = #tpu.dot_dimension_numbers<[1], [0], [0], [1], [0, 0, 1, 1], [], []>} : vector<2x128xf32>, vector<128x8xf32>, vector<2x8xf32> -> vector<2x8xf32>
      %cst_30 = arith.constant 0.000000e+00 : f32
      %29 = vector.broadcast %cst_30 : f32 to vector<2x8xf32>
      %30 = arith.maximumf %28, %29 : vector<2x8xf32>
      %c0_31 = arith.constant 0 : index
      %c0_32 = arith.constant 0 : index
      %31 = vector.load %arg4[%c0_31, %c0_32] : memref<8x128xf32, #tpu.memory_space<vmem>>, vector<8x128xf32>
      %cst_33 = arith.constant dense<0.000000e+00> : vector<2x128xf32>
      %32 = tpu.matmul %30, %31, %cst_33 {dimension_numbers = #tpu.dot_dimension_numbers<[1], [0], [0], [1], [0, 0, 1, 1], [], []>} : vector<2x8xf32>, vector<8x128xf32>, vector<2x128xf32> -> vector<2x128xf32>
      %33 = vector.extract_strided_slice %32 {offsets = [0, 0], sizes = [1, 128], strides = [1, 1]} : vector<2x128xf32> to vector<1x128xf32>
      %34 = vector.extract_strided_slice %32 {offsets = [1, 0], sizes = [1, 128], strides = [1, 1]} : vector<2x128xf32> to vector<1x128xf32>
      %35 = arith.addf %33, %34 : vector<1x128xf32>
      %36 = arith.negf %35 : vector<1x128xf32>
      %37 = math.exp %36 : vector<1x128xf32>
      %cst_34 = arith.constant 1.000000e+00 : f32
      %38 = vector.broadcast %cst_34 : f32 to vector<1x128xf32>
      %39 = arith.addf %38, %37 : vector<1x128xf32>
      %40 = arith.divf %38, %39 : vector<1x128xf32>
      %41 = vector.shape_cast %40 : vector<1x128xf32> to vector<1x1x128xf32>
      %c0_35 = arith.constant 0 : index
      %c0_36 = arith.constant 0 : index
      %c0_37 = arith.constant 0 : index
      %42 = vector.load %arg5[%c0_35, %c0_36, %c0_37] : memref<1x1x128xf32, #tpu.memory_space<vmem>>, vector<1x1x128xf32>
      tpu.vector_store %arg5[%c0_35, %c0_36, %c0_37], %41 {strides = array<i32>} : memref<1x1x128xf32, #tpu.memory_space<vmem>>, vector<1x1x128xf32>,
    } else {
    }
    return
  }
  func.func @transform_0(%arg0: i32, %arg1: i32) -> (i32, i32, i32) {
    %c0_i32 = arith.constant 0 : i32
    %c0_i32_0 = arith.constant 0 : i32
    return %arg0, %c0_i32, %arg1 : i32, i32, i32
  }
  func.func @transform_1(%arg0: i32, %arg1: i32) -> (i32, i32) {
    %c0_i32 = arith.constant 0 : i32
    %c0_i32_0 = arith.constant 0 : i32
    %c0_i32_1 = arith.constant 0 : i32
    return %c0_i32, %c0_i32_0 : i32, i32
  }
  func.func @transform_2(%arg0: i32, %arg1: i32) -> (i32, i32) {
    %c0_i32 = arith.constant 0 : i32
    %c0_i32_0 = arith.constant 0 : i32
    %c0_i32_1 = arith.constant 0 : i32
    return %c0_i32, %c0_i32_0 : i32, i32
  }
  func.func @transform_3(%arg0: i32, %arg1: i32) -> (i32, i32, i32) {
    %c0_i32 = arith.constant 0 : i32
    %c0_i32_0 = arith.constant 0 : i32
    %c0_i32_1 = arith.constant 0 : i32
    return %arg0, %c0_i32, %c0_i32_0 : i32, i32, i32
  }
}

</mosaic_0001>

<llo_original>
// kernel: tpu_custom_call.1
$region0: #{tpu_custom_call.1}
  #allocation0 [shape = 'u32[]', space=smem, size = 0x4, offset = 0x4, fixed_abs, tag = 'smem constant byte address 0x4 - core index']
  #allocation1 [shape = 'u32[144,128]{1,0:T(1,128)}', space=vmem, size = 0x12000, scoped, tag = 'internal scratch']
  #allocation2 [shape = 'f32[1,128,128]{2,1,0:T(8,128)}', space=vmem, size = 0x10000, scoped, tag = 'scratch operand']
  #allocation3 [shape = 'f32[1,128,128]{2,1,0:T(8,128)}', space=vmem, size = 0x10000, scoped, tag = 'scratch operand']
  %s0 = inlined_call_operand.hbm [shape: f32[2,128,256], index: 0, kind: input, shape index: {}]
  %s1 = inlined_call_operand.vmem [shape: f32[128,8], index: 1, kind: input, shape index: {}]
  %s2 = inlined_call_operand.vmem [shape: f32[8,128], index: 2, kind: input, shape index: {}]
  %s3 = inlined_call_operand.hbm [shape: f32[2,1,128], index: 3, kind: output, shape index: {}]
  %s4 = sld [smem:[#allocation0]]
  $region57: #{tpu_custom_call.1} parent=0
    _
  %s6 = ssub.s32 1, %s4
  %s7 = scalar_select 0, %s6, %s4
  $region1: #{tpu_custom_call.1} parent=0
    #allocation4 [shape = 'u8[262144]{0}', space=vmem, size = 0x40000, scoped, tag = 'input window, operand 0']
    #allocation5 [shape = 's32[2]{0}', space=sflag, size = 0x8, scoped, tag = 'scoped memory for tpu_custom_call.1']
    #allocation6 [shape = 's32[2]{0}', space=sflag, size = 0x8, scoped, tag = 'scoped memory for tpu_custom_call.1']
    #allocation7 [shape = 'u8[1024]{0}', space=vmem, size = 0x400, scoped, tag = 'output window, operand 0']
    %8 = vsyncpa [#allocation5], 0
    %s9 = scalar_lea.sflag [#allocation5], 1
    %10 = vsyncpa %s9, 0
    %11 = vsyncpa [#allocation6], 0
    %s12 = scalar_lea.sflag [#allocation6], 1
    %13 = vsyncpa %s12, 0
    loop: start=0, step=1, limit=4
    $region2: #{tpu_custom_call.1} parent=1 // loop_pre_header
      _
    $region3: #{tpu_custom_call.1} parent=1 // loop_header
      %s15 = sphi 0, %s19
      %p16 = scmp.ge.s32.totalorder %s15, 4
      %s22 = sphi 0, %s34
      %s23 = sphi 0, %s30
      %s24 = sphi 0, %s22
      %s25 = sphi 0, %s23
      %s26 = sphi 0, %s24
      %s27 = sphi 0, %s25
      %s39 = sphi 0, %s41
      %s42 = sphi 0, %s39
      %s43 = sphi 0, %s42
      %s59 = sphi 0, %s43
      %s63 = sphi 0, %s63
      %s65 = sphi 0, %s63
      %s66 = sphi 0, %s65
      %s80 = sphi 0, %s66
      %s84 = sphi 0, %s84
      %s86 = sphi 0, %s84
      %s87 = sphi 0, %s86
      %s101 = sphi 0, %s87
      %s107 = sphi 0, %s109
      %s110 = sphi 0, %s107
      %s111 = sphi 0, %s110
      %s127 = sphi 0, %s111
    $region4: #{tpu_custom_call.1} parent=1 // loop_header_branch
      %18 = sbr.rel (%p16) target = $region8
    $region5: #{tpu_custom_call.1} parent=1 // loop_body
      %s20 = ssub.s32 %s15, 1
      %s21 = ssub.s32 %s15, 2
      %s28 = sadd.s32 1, %s23
      %p29 = scmp.ge.s32.totalorder %s28, 1
      %s30 = scalar_select %p29, 0, %s28
      %s31 = sadd.s32 1, %s22
      %s32 = scalar_select %p29, %s31, %s22
      %p33 = scmp.ge.s32.totalorder %s32, 2
      %s34 = scalar_select %p33, 0, %s32
      %s35 = ssub.s32 %s22, %s34
      %s36 = ssub.s32 %s23, %s30
      %s37 = sor.u32 %s35, %s36
      %p38 = scmp.eq.s32.totalorder %s37, 0
      %s40 = sadd.s32 %s39, 1
      %s41 = scalar_select %p38, %s39, %s40
      %p44 = pneg %p38
      %p45 = scmp.eq.s32.totalorder %s15, 1
      %p46 = por %p44, %p45
      %p47 = scmp.ne.s32.totalorder %s39, %s42
      %p48 = scmp.eq.s32.totalorder %s15, 0
      %p49 = por %p47, %p48
      %p50 = scmp.ne.s32.totalorder %s39, %s42
      %p51 = scmp.eq.s32.totalorder %s20, 1
      %p52 = por %p50, %p51
      %p53 = scmp.ne.s32.totalorder %s42, %s43
      %p54 = scmp.eq.s32.totalorder %s20, 0
      %p55 = por %p53, %p54
      %p56 = scmp.ne.s32.totalorder %s42, %s43
      %p57 = scmp.eq.s32.totalorder %s21, 1
      %p58 = por %p56, %p57
      %p60 = scmp.ne.s32.totalorder %s43, %s59
      %p61 = scmp.eq.s32.totalorder %s21, 0
      %p62 = por %p60, %p61
      %s64 = sadd.s32 %s63, 1
      %p67 = scmp.eq.s32.totalorder %s15, 1
      %p68 = scmp.ne.s32.totalorder %s63, %s65
      %p69 = scmp.eq.s32.totalorder %s15, 0
      %p70 = por %p68, %p69
      %p71 = scmp.ne.s32.totalorder %s63, %s65
      %p72 = scmp.eq.s32.totalorder %s20, 1
      %p73 = por %p71, %p72
      %p74 = scmp.ne.s32.totalorder %s65, %s66
      %p75 = scmp.eq.s32.totalorder %s20, 0
      %p76 = por %p74, %p75
      %p77 = scmp.ne.s32.totalorder %s65, %s66
      %p78 = scmp.eq.s32.totalorder %s21, 1
      %p79 = por %p77, %p78
      %p81 = scmp.ne.s32.totalorder %s66, %s80
      %p82 = scmp.eq.s32.totalorder %s21, 0
      %p83 = por %p81, %p82
      %s85 = sadd.s32 %s84, 1
      %p88 = scmp.eq.s32.totalorder %s15, 1
      %p89 = scmp.ne.s32.totalorder %s84, %s86
      %p90 = scmp.eq.s32.totalorder %s15, 0
      %p91 = por %p89, %p90
      %p92 = scmp.ne.s32.totalorder %s84, %s86
      %p93 = scmp.eq.s32.totalorder %s20, 1
      %p94 = por %p92, %p93
      %p95 = scmp.ne.s32.totalorder %s86, %s87
      %p96 = scmp.eq.s32.totalorder %s20, 0
      %p97 = por %p95, %p96
      %p98 = scmp.ne.s32.totalorder %s86, %s87
      %p99 = scmp.eq.s32.totalorder %s21, 1
      %p100 = por %p98, %p99
      %p102 = scmp.ne.s32.totalorder %s87, %s101
      %p103 = scmp.eq.s32.totalorder %s21, 0
      %p104 = por %p102, %p103
      %s105 = ssub.s32 %s22, %s34
      %p106 = scmp.eq.s32.totalorder %s105, 0
      %s108 = sadd.s32 %s107, 1
      %s109 = scalar_select %p106, %s107, %s108
      %p112 = pneg %p106
      %p113 = scmp.eq.s32.totalorder %s15, 1
      %p114 = por %p112, %p113
      %p115 = scmp.ne.s32.totalorder %s107, %s110
      %p116 = scmp.eq.s32.totalorder %s15, 0
      %p117 = por %p115, %p116
      %p118 = scmp.ne.s32.totalorder %s107, %s110
      %p119 = scmp.eq.s32.totalorder %s20, 1
      %p120 = por %p118, %p119
      %p121 = scmp.ne.s32.totalorder %s110, %s111
      %p122 = scmp.eq.s32.totalorder %s20, 0
      %p123 = por %p121, %p122
      %p124 = scmp.ne.s32.totalorder %s110, %s111
      %p125 = scmp.eq.s32.totalorder %s21, 1
      %p126 = por %p124, %p125
      %p128 = scmp.ne.s32.totalorder %s111, %s127
      %p129 = scmp.eq.s32.totalorder %s21, 0
      %p130 = por %p128, %p129
      %p131 = scmp.le.s32.totalorder 1, %s15
      %p132 = scmp.lt.s32.totalorder %s15, 3
      %p133 = pnand %p131, %p132
      %p134 = pneg %p133
      // Predicated region
      $region9: #{tpu_custom_call.1} parent=5 // pred_check
        _
      $region10: #{tpu_custom_call.1} parent=5 // pred_check_branch
        %136 = sbr.rel (%p133) target = $region12
      $region11: #{tpu_custom_call.1} parent=5 // pred_region
        %s137 = ssub.s32 %s15, 1
        // Predicated region
        $region13: #{tpu_custom_call.1} parent=11 // pred_check
          %p138 = pneg %p76
        $region14: #{tpu_custom_call.1} parent=11 // pred_check_branch
          %140 = sbr.rel (%p138) target = $region16
        $region15: #{tpu_custom_call.1} parent=11 // pred_region
          _
        $region16: #{tpu_custom_call.1} parent=11 // pred_fallthru
          _
        // Predicated region
        $region17: #{tpu_custom_call.1} parent=11 // pred_check
          %p141 = pneg %p97
        $region18: #{tpu_custom_call.1} parent=11 // pred_check_branch
          %143 = sbr.rel (%p141) target = $region20
        $region19: #{tpu_custom_call.1} parent=11 // pred_region
          _
        $region20: #{tpu_custom_call.1} parent=11 // pred_fallthru
          _
      $region12: #{tpu_custom_call.1} parent=5 // pred_fallthru
        _
      %p144 = scmp.lt.s32.totalorder %s15, 2
      // Predicated region
      $region21: #{tpu_custom_call.1} parent=5 // pred_check
        %p145 = pneg %p144
      $region22: #{tpu_custom_call.1} parent=5 // pred_check_branch
        %147 = sbr.rel (%p145) target = $region24
      $region23: #{tpu_custom_call.1} parent=5 // pred_region
        // Predicated region
        $region25: #{tpu_custom_call.1} parent=23 // pred_check
          %p148 = pneg %p49
        $region26: #{tpu_custom_call.1} parent=23 // pred_check_branch
          %150 = sbr.rel (%p148) target = $region28
        $region27: #{tpu_custom_call.1} parent=23 // pred_region
          %s151 = sand.u32 %s39, 1
          %s152 = scalar_lea.sflag [#allocation5], %s151
          %s153 = sand.u32 %s39, 1
          %s154 = smul.addr %s153, 256
          %s155 = scalar_lea.vmem [#allocation4], %s154
          %s156 = smul.u32 2, %s23
          %s158 = ssub.s32 4096, 4096
          %159 = vsyncadd %s152, %s158
          %s160 = smul.addr %s22, 32
          %s161 = sadd.s32 %s156, %s160
          %s162 = smul.addr %s161, 128
          %s163 = scalar_lea.hbm %s0, %s162
          %s164 = sshll.u32 %s155, 4
          %s165 = int_to_ptr.vmem [resolvable:$true] %s164
          %170 = dma.hbm_to_vmem [thread:$0]  %s163, 4096, %s165, %s152, 256, 256, 16
        $region28: #{tpu_custom_call.1} parent=23 // pred_fallthru
          _
      $region24: #{tpu_custom_call.1} parent=5 // pred_fallthru
        _
      %p171 = scmp.le.s32.totalorder 1, %s15
      %p172 = scmp.lt.s32.totalorder %s15, 3
      %p173 = pnand %p171, %p172
      %p174 = pneg %p173
      // Predicated region
      $region29: #{tpu_custom_call.1} parent=5 // pred_check
        _
      $region30: #{tpu_custom_call.1} parent=5 // pred_check_branch
        %176 = sbr.rel (%p173) target = $region32
      $region31: #{tpu_custom_call.1} parent=5 // pred_region
        %s177 = ssub.s32 %s15, 1
        %s178 = sand.u32 %s42, 1
        %s179 = scalar_lea.sflag [#allocation5], %s178
        %s180 = sand.u32 %s42, 1
        %s181 = smul.addr %s180, 256
        %s182 = scalar_lea.vmem [#allocation4], %s181
        // Predicated region
        $region33: #{tpu_custom_call.1} parent=31 // pred_check
          %p183 = pneg %p55
        $region34: #{tpu_custom_call.1} parent=31 // pred_check_branch
          %185 = sbr.rel (%p183) target = $region36
        $region35: #{tpu_custom_call.1} parent=31 // pred_region
          %186 = dma.done %s179, 4096
        $region36: #{tpu_custom_call.1} parent=31 // pred_fallthru
          _
        %s187 = sand.u32 %s42, 1
        %s188 = scalar_lea.sflag [#allocation5], %s187
        %s189 = sand.u32 %s42, 1
        %s190 = smul.addr %s189, 256
        %s191 = scalar_lea.vmem [#allocation4], %s190
        %p192 = pneg %p55
        %p193 = pneg %p52
        %p194 = pneg %p76
        %p195 = pneg %p73
        %p196 = pneg %p97
        %p197 = pneg %p94
        %p198 = pneg %p123
        %p199 = pneg %p120
        %s200 = sand.u32 %s110, 1
        %s201 = scalar_lea.sflag [#allocation6], %s200
        %s202 = sand.u32 %s110, 1
        %s203 = scalar_lea.vmem [#allocation7], %s202
        %s204 = smul.u32 2, %s25
        %p205 = scmp.eq.s32.totalorder %s25, 0
        // Predicated region
        $region37: #{tpu_custom_call.1} parent=31 // pred_check
          %p206 = pneg %p205
        $region38: #{tpu_custom_call.1} parent=31 // pred_check_branch
          %208 = sbr.rel (%p206) target = $region40
        $region39: #{tpu_custom_call.1} parent=31 // pred_region
          %209 = vst [vmem:[#allocation2] sm:$0xff] 0.0
          %210 = vst [vmem:[#allocation2 + $0x8] sm:$0xff] 0.0
          %211 = vst [vmem:[#allocation2 + $0x10] sm:$0xff] 0.0
          %212 = vst [vmem:[#allocation2 + $0x18] sm:$0xff] 0.0
          %213 = vst [vmem:[#allocation2 + $0x20] sm:$0xff] 0.0
          %214 = vst [vmem:[#allocation2 + $0x28] sm:$0xff] 0.0
          %215 = vst [vmem:[#allocation2 + $0x30] sm:$0xff] 0.0
          %216 = vst [vmem:[#allocation2 + $0x38] sm:$0xff] 0.0
          %217 = vst [vmem:[#allocation2 + $0x40] sm:$0xff] 0.0
          %218 = vst [vmem:[#allocation2 + $0x48] sm:$0xff] 0.0
          %219 = vst [vmem:[#allocation2 + $0x50] sm:$0xff] 0.0
          %220 = vst [vmem:[#allocation2 + $0x58] sm:$0xff] 0.0
          %221 = vst [vmem:[#allocation2 + $0x60] sm:$0xff] 0.0
          %222 = vst [vmem:[#allocation2 + $0x68] sm:$0xff] 0.0
          %223 = vst [vmem:[#allocation2 + $0x70] sm:$0xff] 0.0
          %224 = vst [vmem:[#allocation2 + $0x78] sm:$0xff] 0.0
          %225 = vst [vmem:[#allocation3] sm:$0xff] -inf
          %226 = vst [vmem:[#allocation3 + $0x8] sm:$0xff] -inf
          %227 = vst [vmem:[#allocation3 + $0x10] sm:$0xff] -inf
          %228 = vst [vmem:[#allocation3 + $0x18] sm:$0xff] -inf
          %229 = vst [vmem:[#allocation3 + $0x20] sm:$0xff] -inf
          %230 = vst [vmem:[#allocation3 + $0x28] sm:$0xff] -inf
          %231 = vst [vmem:[#allocation3 + $0x30] sm:$0xff] -inf
          %232 = vst [vmem:[#allocation3 + $0x38] sm:$0xff] -inf
          %233 = vst [vmem:[#allocation3 + $0x40] sm:$0xff] -inf
          %234 = vst [vmem:[#allocation3 + $0x48] sm:$0xff] -inf
          %235 = vst [vmem:[#allocation3 + $0x50] sm:$0xff] -inf
          %236 = vst [vmem:[#allocation3 + $0x58] sm:$0xff] -inf
          %237 = vst [vmem:[#allocation3 + $0x60] sm:$0xff] -inf
          %238 = vst [vmem:[#allocation3 + $0x68] sm:$0xff] -inf
          %239 = vst [vmem:[#allocation3 + $0x70] sm:$0xff] -inf
          %240 = vst [vmem:[#allocation3 + $0x78] sm:$0xff] -inf
        $region40: #{tpu_custom_call.1} parent=31 // pred_fallthru
          _
        %v241 = vld [vmem:[#allocation2] sm:$0xff]
        %v242 = vld [vmem:[#allocation2 + $0x8] sm:$0xff]
        %v243 = vld [vmem:[#allocation2 + $0x10] sm:$0xff]
        %v244 = vld [vmem:[#allocation2 + $0x18] sm:$0xff]
        %v245 = vld [vmem:[#allocation2 + $0x20] sm:$0xff]
        %v246 = vld [vmem:[#allocation2 + $0x28] sm:$0xff]
        %v247 = vld [vmem:[#allocation2 + $0x30] sm:$0xff]
        %v248 = vld [vmem:[#allocation2 + $0x38] sm:$0xff]
        %v249 = vld [vmem:[#allocation2 + $0x40] sm:$0xff]
        %v250 = vld [vmem:[#allocation2 + $0x48] sm:$0xff]
        %v251 = vld [vmem:[#allocation2 + $0x50] sm:$0xff]
        %v252 = vld [vmem:[#allocation2 + $0x58] sm:$0xff]
        %v253 = vld [vmem:[#allocation2 + $0x60] sm:$0xff]
        %v254 = vld [vmem:[#allocation2 + $0x68] sm:$0xff]
        %v255 = vld [vmem:[#allocation2 + $0x70] sm:$0xff]
        %v256 = vld [vmem:[#allocation2 + $0x78] sm:$0xff]
        %v257 = vld [vmem:[#allocation3] sm:$0xff]
        %v258 = vld [vmem:[#allocation3 + $0x8] sm:$0xff]
        %v259 = vld [vmem:[#allocation3 + $0x10] sm:$0xff]
        %v260 = vld [vmem:[#allocation3 + $0x18] sm:$0xff]
        %v261 = vld [vmem:[#allocation3 + $0x20] sm:$0xff]
        %v262 = vld [vmem:[#allocation3 + $0x28] sm:$0xff]
        %v263 = vld [vmem:[#allocation3 + $0x30] sm:$0xff]
        %v264 = vld [vmem:[#allocation3 + $0x38] sm:$0xff]
        %v265 = vld [vmem:[#allocation3 + $0x40] sm:$0xff]
        %v266 = vld [vmem:[#allocation3 + $0x48] sm:$0xff]
        %v267 = vld [vmem:[#allocation3 + $0x50] sm:$0xff]
        %v268 = vld [vmem:[#allocation3 + $0x58] sm:$0xff]
        %v269 = vld [vmem:[#allocation3 + $0x60] sm:$0xff]
        %v270 = vld [vmem:[#allocation3 + $0x68] sm:$0xff]
        %v271 = vld [vmem:[#allocation3 + $0x70] sm:$0xff]
        %v272 = vld [vmem:[#allocation3 + $0x78] sm:$0xff]
        %v273 = vld [vmem:[%s182] sm:$0xff]
        %v274 = vld [vmem:[%s182 + $0x10] sm:$0xff]
        %v275 = vld [vmem:[%s182 + $0x20] sm:$0xff]
        %v276 = vld [vmem:[%s182 + $0x30] sm:$0xff]
        %v277 = vld [vmem:[%s182 + $0x40] sm:$0xff]
        %v278 = vld [vmem:[%s182 + $0x50] sm:$0xff]
        %v279 = vld [vmem:[%s182 + $0x60] sm:$0xff]
        %v280 = vld [vmem:[%s182 + $0x70] sm:$0xff]
        %v281 = vld [vmem:[%s182 + $0x80] sm:$0xff]
        %v282 = vld [vmem:[%s182 + $0x90] sm:$0xff]
        %v283 = vld [vmem:[%s182 + $0xa0] sm:$0xff]
        %v284 = vld [vmem:[%s182 + $0xb0] sm:$0xff]
        %v285 = vld [vmem:[%s182 + $0xc0] sm:$0xff]
        %v286 = vld [vmem:[%s182 + $0xd0] sm:$0xff]
        %v287 = vld [vmem:[%s182 + $0xe0] sm:$0xff]
        %v288 = vld [vmem:[%s182 + $0xf0] sm:$0xff]
        %v289 = vadd.f32 %v241, %v273
        %v290 = vadd.f32 %v242, %v274
        %v291 = vadd.f32 %v243, %v275
        %v292 = vadd.f32 %v244, %v276
        %v293 = vadd.f32 %v245, %v277
        %v294 = vadd.f32 %v246, %v278
        %v295 = vadd.f32 %v247, %v279
        %v296 = vadd.f32 %v248, %v280
        %v297 = vadd.f32 %v249, %v281
        %v298 = vadd.f32 %v250, %v282
        %v299 = vadd.f32 %v251, %v283
        %v300 = vadd.f32 %v252, %v284
        %v301 = vadd.f32 %v253, %v285
        %v302 = vadd.f32 %v254, %v286
        %v303 = vadd.f32 %v255, %v287
        %v304 = vadd.f32 %v256, %v288
        %v305 = vmax.f32 %v257, %v273
        %v306 = vmax.f32 %v258, %v274
        %v307 = vmax.f32 %v259, %v275
        %v308 = vmax.f32 %v260, %v276
        %v309 = vmax.f32 %v261, %v277
        %v310 = vmax.f32 %v262, %v278
        %v311 = vmax.f32 %v263, %v279
        %v312 = vmax.f32 %v264, %v280
        %v313 = vmax.f32 %v265, %v281
        %v314 = vmax.f32 %v266, %v282
        %v315 = vmax.f32 %v267, %v283
        %v316 = vmax.f32 %v268, %v284
        %v317 = vmax.f32 %v269, %v285
        %v318 = vmax.f32 %v270, %v286
        %v319 = vmax.f32 %v271, %v287
        %v320 = vmax.f32 %v272, %v288
        %s321 = scalar_lea.vmem %s182, 8 [#allocation4]
        %v322 = vld [vmem:[%s321] sm:$0xff]
        %v323 = vld [vmem:[%s321 + $0x10] sm:$0xff]
        %v324 = vld [vmem:[%s321 + $0x20] sm:$0xff]
        %v325 = vld [vmem:[%s321 + $0x30] sm:$0xff]
        %v326 = vld [vmem:[%s321 + $0x40] sm:$0xff]
        %v327 = vld [vmem:[%s321 + $0x50] sm:$0xff]
        %v328 = vld [vmem:[%s321 + $0x60] sm:$0xff]
        %v329 = vld [vmem:[%s321 + $0x70] sm:$0xff]
        %v330 = vld [vmem:[%s321 + $0x80] sm:$0xff]
        %v331 = vld [vmem:[%s321 + $0x90] sm:$0xff]
        %v332 = vld [vmem:[%s321 + $0xa0] sm:$0xff]
        %v333 = vld [vmem:[%s321 + $0xb0] sm:$0xff]
        %v334 = vld [vmem:[%s321 + $0xc0] sm:$0xff]
        %v335 = vld [vmem:[%s321 + $0xd0] sm:$0xff]
        %v336 = vld [vmem:[%s321 + $0xe0] sm:$0xff]
        %v337 = vld [vmem:[%s321 + $0xf0] sm:$0xff]
        %v338 = vadd.f32 %v289, %v322
        %v339 = vadd.f32 %v290, %v323
        %v340 = vadd.f32 %v291, %v324
        %v341 = vadd.f32 %v292, %v325
        %v342 = vadd.f32 %v293, %v326
        %v343 = vadd.f32 %v294, %v327
        %v344 = vadd.f32 %v295, %v328
        %v345 = vadd.f32 %v296, %v329
        %v346 = vadd.f32 %v297, %v330
        %v347 = vadd.f32 %v298, %v331
        %v348 = vadd.f32 %v299, %v332
        %v349 = vadd.f32 %v300, %v333
        %v350 = vadd.f32 %v301, %v334
        %v351 = vadd.f32 %v302, %v335
        %v352 = vadd.f32 %v303, %v336
        %v353 = vadd.f32 %v304, %v337
        %v354 = vmax.f32 %v305, %v322
        %v355 = vmax.f32 %v306, %v323
        %v356 = vmax.f32 %v307, %v324
        %v357 = vmax.f32 %v308, %v325
        %v358 = vmax.f32 %v309, %v326
        %v359 = vmax.f32 %v310, %v327
        %v360 = vmax.f32 %v311, %v328
        %v361 = vmax.f32 %v312, %v329
        %v362 = vmax.f32 %v313, %v330
        %v363 = vmax.f32 %v314, %v331
        %v364 = vmax.f32 %v315, %v332
        %v365 = vmax.f32 %v316, %v333
        %v366 = vmax.f32 %v317, %v334
        %v367 = vmax.f32 %v318, %v335
        %v368 = vmax.f32 %v319, %v336
        %v369 = vmax.f32 %v320, %v337
        %370 = vst [vmem:[#allocation2] sm:$0xff] %v338
        %371 = vst [vmem:[#allocation2 + $0x8] sm:$0xff] %v339
        %372 = vst [vmem:[#allocation2 + $0x10] sm:$0xff] %v340
        %373 = vst [vmem:[#allocation2 + $0x18] sm:$0xff] %v341
        %374 = vst [vmem:[#allocation2 + $0x20] sm:$0xff] %v342
        %375 = vst [vmem:[#allocation2 + $0x28] sm:$0xff] %v343
        %376 = vst [vmem:[#allocation2 + $0x30] sm:$0xff] %v344
        %377 = vst [vmem:[#allocation2 + $0x38] sm:$0xff] %v345
        %378 = vst [vmem:[#allocation2 + $0x40] sm:$0xff] %v346
        %379 = vst [vmem:[#allocation2 + $0x48] sm:$0xff] %v347
        %380 = vst [vmem:[#allocation2 + $0x50] sm:$0xff] %v348
        %381 = vst [vmem:[#allocation2 + $0x58] sm:$0xff] %v349
        %382 = vst [vmem:[#allocation2 + $0x60] sm:$0xff] %v350
        %383 = vst [vmem:[#allocation2 + $0x68] sm:$0xff] %v351
        %384 = vst [vmem:[#allocation2 + $0x70] sm:$0xff] %v352
        %385 = vst [vmem:[#allocation2 + $0x78] sm:$0xff] %v353
        %386 = vst [vmem:[#allocation3] sm:$0xff] %v354
        %387 = vst [vmem:[#allocation3 + $0x8] sm:$0xff] %v355
        %388 = vst [vmem:[#allocation3 + $0x10] sm:$0xff] %v356
        %389 = vst [vmem:[#allocation3 + $0x18] sm:$0xff] %v357
        %390 = vst [vmem:[#allocation3 + $0x20] sm:$0xff] %v358
        %391 = vst [vmem:[#allocation3 + $0x28] sm:$0xff] %v359
        %392 = vst [vmem:[#allocation3 + $0x30] sm:$0xff] %v360
        %393 = vst [vmem:[#allocation3 + $0x38] sm:$0xff] %v361
        %394 = vst [vmem:[#allocation3 + $0x40] sm:$0xff] %v362
        %395 = vst [vmem:[#allocation3 + $0x48] sm:$0xff] %v363
        %396 = vst [vmem:[#allocation3 + $0x50] sm:$0xff] %v364
        %397 = vst [vmem:[#allocation3 + $0x58] sm:$0xff] %v365
        %398 = vst [vmem:[#allocation3 + $0x60] sm:$0xff] %v366
        %399 = vst [vmem:[#allocation3 + $0x68] sm:$0xff] %v367
        %400 = vst [vmem:[#allocation3 + $0x70] sm:$0xff] %v368
        %401 = vst [vmem:[#allocation3 + $0x78] sm:$0xff] %v369
        // Predicated region
        $region41: #{tpu_custom_call.1} parent=31 // pred_check
          %p402 = pneg %p205
        $region42: #{tpu_custom_call.1} parent=31 // pred_check_branch
          %404 = sbr.rel (%p402) target = $region44
        $region43: #{tpu_custom_call.1} parent=31 // pred_region
          %v405 = vld [vmem:[#allocation2] sm:$0xff]
          %v406 = vld [vmem:[#allocation2 + $0x8] sm:$0xff]
          %v407 = vld [vmem:[#allocation2 + $0x10] sm:$0xff]
          %v408 = vld [vmem:[#allocation2 + $0x18] sm:$0xff]
          %v409 = vld [vmem:[#allocation2 + $0x20] sm:$0xff]
          %v410 = vld [vmem:[#allocation2 + $0x28] sm:$0xff]
          %v411 = vld [vmem:[#allocation2 + $0x30] sm:$0xff]
          %v412 = vld [vmem:[#allocation2 + $0x38] sm:$0xff]
          %v413 = vld [vmem:[#allocation2 + $0x40] sm:$0xff]
          %v414 = vld [vmem:[#allocation2 + $0x48] sm:$0xff]
          %v415 = vld [vmem:[#allocation2 + $0x50] sm:$0xff]
          %v416 = vld [vmem:[#allocation2 + $0x58] sm:$0xff]
          %v417 = vld [vmem:[#allocation2 + $0x60] sm:$0xff]
          %v418 = vld [vmem:[#allocation2 + $0x68] sm:$0xff]
          %v419 = vld [vmem:[#allocation2 + $0x70] sm:$0xff]
          %v420 = vld [vmem:[#allocation2 + $0x78] sm:$0xff]
          %421 = vadd.xlane.f32.xlu0 %v405
          %v422 = vpop.xlane.xlu0 %421
          %423 = vadd.xlane.f32.xlu0 %v406
          %v424 = vpop.xlane.xlu0 %423
          %425 = vadd.xlane.f32.xlu0 %v407
          %v426 = vpop.xlane.xlu0 %425
          %427 = vadd.xlane.f32.xlu0 %v408
          %v428 = vpop.xlane.xlu0 %427
          %429 = vadd.xlane.f32.xlu0 %v409
          %v430 = vpop.xlane.xlu0 %429
          %431 = vadd.xlane.f32.xlu0 %v410
          %v432 = vpop.xlane.xlu0 %431
          %433 = vadd.xlane.f32.xlu0 %v411
          %v434 = vpop.xlane.xlu0 %433
          %435 = vadd.xlane.f32.xlu0 %v412
          %v436 = vpop.xlane.xlu0 %435
          %437 = vadd.xlane.f32.xlu0 %v413
          %v438 = vpop.xlane.xlu0 %437
          %439 = vadd.xlane.f32.xlu0 %v414
          %v440 = vpop.xlane.xlu0 %439
          %441 = vadd.xlane.f32.xlu0 %v415
          %v442 = vpop.xlane.xlu0 %441
          %443 = vadd.xlane.f32.xlu0 %v416
          %v444 = vpop.xlane.xlu0 %443
          %445 = vadd.xlane.f32.xlu0 %v417
          %v446 = vpop.xlane.xlu0 %445
          %447 = vadd.xlane.f32.xlu0 %v418
          %v448 = vpop.xlane.xlu0 %447
          %449 = vadd.xlane.f32.xlu0 %v419
          %v450 = vpop.xlane.xlu0 %449
          %451 = vadd.xlane.f32.xlu0 %v420
          %v452 = vpop.xlane.xlu0 %451
          %v453 = vmul.f32 %v422, 0.00390625
          %v454 = vmul.f32 %v424, 0.00390625
          %v455 = vmul.f32 %v426, 0.00390625
          %v456 = vmul.f32 %v428, 0.00390625
          %v457 = vmul.f32 %v430, 0.00390625
          %v458 = vmul.f32 %v432, 0.00390625
          %v459 = vmul.f32 %v434, 0.00390625
          %v460 = vmul.f32 %v436, 0.00390625
          %v461 = vmul.f32 %v438, 0.00390625
          %v462 = vmul.f32 %v440, 0.00390625
          %v463 = vmul.f32 %v442, 0.00390625
          %v464 = vmul.f32 %v444, 0.00390625
          %v465 = vmul.f32 %v446, 0.00390625
          %v466 = vmul.f32 %v448, 0.00390625
          %v467 = vmul.f32 %v450, 0.00390625
          %v468 = vmul.f32 %v452, 0.00390625
          %v469 = vld [vmem:[#allocation3] sm:$0xff]
          %v470 = vld [vmem:[#allocation3 + $0x8] sm:$0xff]
          %v471 = vld [vmem:[#allocation3 + $0x10] sm:$0xff]
          %v472 = vld [vmem:[#allocation3 + $0x18] sm:$0xff]
          %v473 = vld [vmem:[#allocation3 + $0x20] sm:$0xff]
          %v474 = vld [vmem:[#allocation3 + $0x28] sm:$0xff]
          %v475 = vld [vmem:[#allocation3 + $0x30] sm:$0xff]
          %v476 = vld [vmem:[#allocation3 + $0x38] sm:$0xff]
          %v477 = vld [vmem:[#allocation3 + $0x40] sm:$0xff]
          %v478 = vld [vmem:[#allocation3 + $0x48] sm:$0xff]
          %v479 = vld [vmem:[#allocation3 + $0x50] sm:$0xff]
          %v480 = vld [vmem:[#allocation3 + $0x58] sm:$0xff]
          %v481 = vld [vmem:[#allocation3 + $0x60] sm:$0xff]
          %v482 = vld [vmem:[#allocation3 + $0x68] sm:$0xff]
          %v483 = vld [vmem:[#allocation3 + $0x70] sm:$0xff]
          %v484 = vld [vmem:[#allocation3 + $0x78] sm:$0xff]
          %485 = vmax.xlane.f32.xlu0 %v469
          %v486 = vpop.xlane.xlu0 %485
          %487 = vmax.xlane.f32.xlu0 %v470
          %v488 = vpop.xlane.xlu0 %487
          %489 = vmax.xlane.f32.xlu0 %v471
          %v490 = vpop.xlane.xlu0 %489
          %491 = vmax.xlane.f32.xlu0 %v472
          %v492 = vpop.xlane.xlu0 %491
          %493 = vmax.xlane.f32.xlu0 %v473
          %v494 = vpop.xlane.xlu0 %493
          %495 = vmax.xlane.f32.xlu0 %v474
          %v496 = vpop.xlane.xlu0 %495
          %497 = vmax.xlane.f32.xlu0 %v475
          %v498 = vpop.xlane.xlu0 %497
          %499 = vmax.xlane.f32.xlu0 %v476
          %v500 = vpop.xlane.xlu0 %499
          %501 = vmax.xlane.f32.xlu0 %v477
          %v502 = vpop.xlane.xlu0 %501
          %503 = vmax.xlane.f32.xlu0 %v478
          %v504 = vpop.xlane.xlu0 %503
          %505 = vmax.xlane.f32.xlu0 %v479
          %v506 = vpop.xlane.xlu0 %505
          %507 = vmax.xlane.f32.xlu0 %v480
          %v508 = vpop.xlane.xlu0 %507
          %509 = vmax.xlane.f32.xlu0 %v481
          %v510 = vpop.xlane.xlu0 %509
          %511 = vmax.xlane.f32.xlu0 %v482
          %v512 = vpop.xlane.xlu0 %511
          %513 = vmax.xlane.f32.xlu0 %v483
          %v514 = vpop.xlane.xlu0 %513
          %515 = vmax.xlane.f32.xlu0 %v484
          %v516 = vpop.xlane.xlu0 %515
          %v533 = vlaneseq
          %v534 = vand.u32 %v533, 127
          %v535 = vlaneseq
          %v536 = vshrl.u32 %v535, 7
          %v537 = vsub.s32 %v534, %v536
          %v538 = vrot.slane %v453, %v537
          %v539 = vadd.s32 %v534, 4294967288
          %v540 = vlaneseq
          %v541 = vshrl.u32 %v540, 7
          %v542 = vsub.s32 %v539, %v541
          %v543 = vrot.slane %v454, %v542
          %vm544 = vcmask 130112
          %v545 = vsel %vm544, %v543, %v538
          %v546 = vadd.s32 %v534, 4294967280
          %v547 = vlaneseq
          %v548 = vshrl.u32 %v547, 7
          %v549 = vsub.s32 %v546, %v548
          %v550 = vrot.slane %v455, %v549
          %vm551 = vcmask 195712
          %v552 = vsel %vm551, %v550, %v545
          %v553 = vadd.s32 %v534, 4294967272
          %v554 = vlaneseq
          %v555 = vshrl.u32 %v554, 7
          %v556 = vsub.s32 %v553, %v555
          %v557 = vrot.slane %v456, %v556
          %vm558 = vcmask 261312
          %v559 = vsel %vm558, %v557, %v552
          %v560 = vadd.s32 %v534, 4294967264
          %v561 = vlaneseq
          %v562 = vshrl.u32 %v561, 7
          %v563 = vsub.s32 %v560, %v562
          %v564 = vrot.slane %v457, %v563
          %vm565 = vcmask 326912
          %v566 = vsel %vm565, %v564, %v559
          %v567 = vadd.s32 %v534, 4294967256
          %v568 = vlaneseq
          %v569 = vshrl.u32 %v568, 7
          %v570 = vsub.s32 %v567, %v569
          %v571 = vrot.slane %v458, %v570
          %vm572 = vcmask 392512
          %v573 = vsel %vm572, %v571, %v566
          %v574 = vadd.s32 %v534, 4294967248
          %v575 = vlaneseq
          %v576 = vshrl.u32 %v575, 7
          %v577 = vsub.s32 %v574, %v576
          %v578 = vrot.slane %v459, %v577
          %vm579 = vcmask 458112
          %v580 = vsel %vm579, %v578, %v573
          %v581 = vadd.s32 %v534, 4294967240
          %v582 = vlaneseq
          %v583 = vshrl.u32 %v582, 7
          %v584 = vsub.s32 %v581, %v583
          %v585 = vrot.slane %v460, %v584
          %vm586 = vcmask 523712
          %v587 = vsel %vm586, %v585, %v580
          %v588 = vadd.s32 %v534, 4294967232
          %v589 = vlaneseq
          %v590 = vshrl.u32 %v589, 7
          %v591 = vsub.s32 %v588, %v590
          %v592 = vrot.slane %v461, %v591
          %vm593 = vcmask 589312
          %v594 = vsel %vm593, %v592, %v587
          %v595 = vadd.s32 %v534, 4294967224
          %v596 = vlaneseq
          %v597 = vshrl.u32 %v596, 7
          %v598 = vsub.s32 %v595, %v597
          %v599 = vrot.slane %v462, %v598
          %vm600 = vcmask 654912
          %v601 = vsel %vm600, %v599, %v594
          %v602 = vadd.s32 %v534, 4294967216
          %v603 = vlaneseq
          %v604 = vshrl.u32 %v603, 7
          %v605 = vsub.s32 %v602, %v604
          %v606 = vrot.slane %v463, %v605
          %vm607 = vcmask 720512
          %v608 = vsel %vm607, %v606, %v601
          %v609 = vadd.s32 %v534, 4294967208
          %v610 = vlaneseq
          %v611 = vshrl.u32 %v610, 7
          %v612 = vsub.s32 %v609, %v611
          %v613 = vrot.slane %v464, %v612
          %vm614 = vcmask 786112
          %v615 = vsel %vm614, %v613, %v608
          %v616 = vadd.s32 %v534, 4294967200
          %v617 = vlaneseq
          %v618 = vshrl.u32 %v617, 7
          %v619 = vsub.s32 %v616, %v618
          %v620 = vrot.slane %v465, %v619
          %vm621 = vcmask 851712
          %v622 = vsel %vm621, %v620, %v615
          %v623 = vadd.s32 %v534, 4294967192
          %v624 = vlaneseq
          %v625 = vshrl.u32 %v624, 7
          %v626 = vsub.s32 %v623, %v625
          %v627 = vrot.slane %v466, %v626
          %vm628 = vcmask 917312
          %v629 = vsel %vm628, %v627, %v622
          %v630 = vadd.s32 %v534, 4294967184
          %v631 = vlaneseq
          %v632 = vshrl.u32 %v631, 7
          %v633 = vsub.s32 %v630, %v632
          %v634 = vrot.slane %v467, %v633
          %vm635 = vcmask 982912
          %v636 = vsel %vm635, %v634, %v629
          %v637 = vadd.s32 %v534, 4294967176
          %v638 = vlaneseq
          %v639 = vshrl.u32 %v638, 7
          %v640 = vsub.s32 %v637, %v639
          %v641 = vrot.slane %v468, %v640
          %vm642 = vcmask 1048512
          %v643 = vsel %vm642, %v641, %v636
          %v661 = vlaneseq
          %v662 = vshrl.u32 %v661, 7
          %v663 = vsub.s32 %v534, %v662
          %v664 = vrot.slane %v486, %v663
          %v665 = vlaneseq
          %v666 = vshrl.u32 %v665, 7
          %v667 = vsub.s32 %v539, %v666
          %v668 = vrot.slane %v488, %v667
          %v669 = vsel %vm544, %v668, %v664
          %v670 = vlaneseq
          %v671 = vshrl.u32 %v670, 7
          %v672 = vsub.s32 %v546, %v671
          %v673 = vrot.slane %v490, %v672
          %v674 = vsel %vm551, %v673, %v669
          %v675 = vlaneseq
          %v676 = vshrl.u32 %v675, 7
          %v677 = vsub.s32 %v553, %v676
          %v678 = vrot.slane %v492, %v677
          %v679 = vsel %vm558, %v678, %v674
          %v680 = vlaneseq
          %v681 = vshrl.u32 %v680, 7
          %v682 = vsub.s32 %v560, %v681
          %v683 = vrot.slane %v494, %v682
          %v684 = vsel %vm565, %v683, %v679
          %v685 = vlaneseq
          %v686 = vshrl.u32 %v685, 7
          %v687 = vsub.s32 %v567, %v686
          %v688 = vrot.slane %v496, %v687
          %v689 = vsel %vm572, %v688, %v684
          %v690 = vlaneseq
          %v691 = vshrl.u32 %v690, 7
          %v692 = vsub.s32 %v574, %v691
          %v693 = vrot.slane %v498, %v692
          %v694 = vsel %vm579, %v693, %v689
          %v695 = vlaneseq
          %v696 = vshrl.u32 %v695, 7
          %v697 = vsub.s32 %v581, %v696
          %v698 = vrot.slane %v500, %v697
          %v699 = vsel %vm586, %v698, %v694
          %v700 = vlaneseq
          %v701 = vshrl.u32 %v700, 7
          %v702 = vsub.s32 %v588, %v701
          %v703 = vrot.slane %v502, %v702
          %v704 = vsel %vm593, %v703, %v699
          %v705 = vlaneseq
          %v706 = vshrl.u32 %v705, 7
          %v707 = vsub.s32 %v595, %v706
          %v708 = vrot.slane %v504, %v707
          %v709 = vsel %vm600, %v708, %v704
          %v710 = vlaneseq
          %v711 = vshrl.u32 %v710, 7
          %v712 = vsub.s32 %v602, %v711
          %v713 = vrot.slane %v506, %v712
          %v714 = vsel %vm607, %v713, %v709
          %v715 = vlaneseq
          %v716 = vshrl.u32 %v715, 7
          %v717 = vsub.s32 %v609, %v716
          %v718 = vrot.slane %v508, %v717
          %v719 = vsel %vm614, %v718, %v714
          %v720 = vlaneseq
          %v721 = vshrl.u32 %v720, 7
          %v722 = vsub.s32 %v616, %v721
          %v723 = vrot.slane %v510, %v722
          %v724 = vsel %vm621, %v723, %v719
          %v725 = vlaneseq
          %v726 = vshrl.u32 %v725, 7
          %v727 = vsub.s32 %v623, %v726
          %v728 = vrot.slane %v512, %v727
          %v729 = vsel %vm628, %v728, %v724
          %v730 = vlaneseq
          %v731 = vshrl.u32 %v730, 7
          %v732 = vsub.s32 %v630, %v731
          %v733 = vrot.slane %v514, %v732
          %v734 = vsel %vm635, %v733, %v729
          %v735 = vlaneseq
          %v736 = vshrl.u32 %v735, 7
          %v737 = vsub.s32 %v637, %v736
          %v738 = vrot.slane %v516, %v737
          %v739 = vsel %vm642, %v738, %v734
          %vm741 = vcmask 1040384
          %v742 = vsel %vm741, %v643, %v739
          %v743 = vld [vmem:[%s1] sm:$0xff]
          %v744 = vld [vmem:[%s1 + $0x8] sm:$0xff]
          %v745 = vld [vmem:[%s1 + $0x10] sm:$0xff]
          %v746 = vld [vmem:[%s1 + $0x18] sm:$0xff]
          %v747 = vld [vmem:[%s1 + $0x20] sm:$0xff]
          %v748 = vld [vmem:[%s1 + $0x28] sm:$0xff]
          %v749 = vld [vmem:[%s1 + $0x30] sm:$0xff]
          %v750 = vld [vmem:[%s1 + $0x38] sm:$0xff]
          %v751 = vld [vmem:[%s1 + $0x40] sm:$0xff]
          %v752 = vld [vmem:[%s1 + $0x48] sm:$0xff]
          %v753 = vld [vmem:[%s1 + $0x50] sm:$0xff]
          %v754 = vld [vmem:[%s1 + $0x58] sm:$0xff]
          %v755 = vld [vmem:[%s1 + $0x60] sm:$0xff]
          %v756 = vld [vmem:[%s1 + $0x68] sm:$0xff]
          %v757 = vld [vmem:[%s1 + $0x70] sm:$0xff]
          %v758 = vld [vmem:[%s1 + $0x78] sm:$0xff]
          %759 = vmatprep.subr.mxu0 0.0
          %760 = vmatpush1.msra.mxu0 %v743
          %761 = vmatprep.subr.mxu0 0.0
          %762 = vmatpush1.msra.mxu0 %v744
          %763 = vmatprep.subr.mxu0 0.0
          %764 = vmatpush1.msra.mxu0 %v745
          %765 = vmatprep.subr.mxu0 0.0
          %766 = vmatpush1.msra.mxu0 %v746
          %767 = vmatprep.subr.mxu0 0.0
          %768 = vmatpush1.msra.mxu0 %v747
          %769 = vmatprep.subr.mxu0 0.0
          %770 = vmatpush1.msra.mxu0 %v748
          %771 = vmatprep.subr.mxu0 0.0
          %772 = vmatpush1.msra.mxu0 %v749
          %773 = vmatprep.subr.mxu0 0.0
          %774 = vmatpush1.msra.mxu0 %v750
          %775 = vmatprep.subr.mxu0 0.0
          %776 = vmatpush1.msra.mxu0 %v751
          %777 = vmatprep.subr.mxu0 0.0
          %778 = vmatpush1.msra.mxu0 %v752
          %779 = vmatprep.subr.mxu0 0.0
          %780 = vmatpush1.msra.mxu0 %v753
          %781 = vmatprep.subr.mxu0 0.0
          %782 = vmatpush1.msra.mxu0 %v754
          %783 = vmatprep.subr.mxu0 0.0
          %784 = vmatpush1.msra.mxu0 %v755
          %785 = vmatprep.subr.mxu0 0.0
          %786 = vmatpush1.msra.mxu0 %v756
          %787 = vmatprep.subr.mxu0 0.0
          %788 = vmatpush1.msra.mxu0 %v757
          %789 = vmatprep.subr.mxu0 0.0
          %790 = vmatpush1.msra.mxu0 %v758
          %791 = vmatprep.subr.mxu0 0.0
          %792 = vmatpush1.msra.mxu0 0.0
          %793 = vmatprep.subr.mxu0 0.0
          %794 = vmatpush1.msra.mxu0 0.0
          %795 = vmatprep.subr.mxu0 0.0
          %796 = vmatpush1.msra.mxu0 0.0
          %797 = vmatprep.subr.mxu0 0.0
          %798 = vmatpush1.msra.mxu0 0.0
          %799 = vmatprep.subr.mxu0 0.0
          %800 = vmatpush1.msra.mxu0 0.0
          %801 = vmatprep.subr.mxu0 0.0
          %802 = vmatpush1.msra.mxu0 0.0
          %803 = vmatprep.subr.mxu0 0.0
          %804 = vmatpush1.msra.mxu0 0.0
          %805 = vmatprep.subr.mxu0 0.0
          %806 = vmatpush1.msra.mxu0 0.0
          %807 = vmatprep.subr.mxu0 0.0
          %808 = vmatpush1.msra.mxu0 0.0
          %809 = vmatprep.subr.mxu0 0.0
          %810 = vmatpush1.msra.mxu0 0.0
          %811 = vmatprep.subr.mxu0 0.0
          %812 = vmatpush1.msra.mxu0 0.0
          %813 = vmatprep.subr.mxu0 0.0
          %814 = vmatpush1.msra.mxu0 0.0
          %815 = vmatprep.subr.mxu0 0.0
          %816 = vmatpush1.msra.mxu0 0.0
          %817 = vmatprep.subr.mxu0 0.0
          %818 = vmatpush1.msra.mxu0 0.0
          %819 = vmatprep.subr.mxu0 0.0
          %820 = vmatpush1.msra.mxu0 0.0
          %821 = vmatprep.subr.mxu0 0.0
          %822 = vmatpush1.msra.mxu0 0.0
          %823 = vmatprep.mubr.f32.mxu0 0.0
          %824 = vmatmul.mubr.f32.gmra.mrb[0].mxu0 %v742
          %v825 = vpop.f32.mrb[0].mxu0
          %v826 = vadd.f32 0.0, %v825
          %v827 = vpop.f32.mrb[0].mxu0
          %828 = vdwg.mxu0
          %v829 = vmax.f32 %v826, 0.0
          %v830 = vld [vmem:[%s2] sm:$0xff]
          %vm831 = vcmask 64512
          %v833 = vsel %vm831, %v829, 0
          %835 = vmatprep.subr.mxu0 0.0
          %836 = vmatpush1.msra.mxu0 %v830
          %837 = vmatprep.subr.mxu0 0.0
          %838 = vmatpush1.msra.mxu0 0.0
          %839 = vmatprep.subr.mxu0 0.0
          %840 = vmatpush1.msra.mxu0 0.0
          %841 = vmatprep.subr.mxu0 0.0
          %842 = vmatpush1.msra.mxu0 0.0
          %843 = vmatprep.subr.mxu0 0.0
          %844 = vmatpush1.msra.mxu0 0.0
          %845 = vmatprep.subr.mxu0 0.0
          %846 = vmatpush1.msra.mxu0 0.0
          %847 = vmatprep.subr.mxu0 0.0
          %848 = vmatpush1.msra.mxu0 0.0
          %849 = vmatprep.subr.mxu0 0.0
          %850 = vmatpush1.msra.mxu0 0.0
          %851 = vmatprep.subr.mxu0 0.0
          %852 = vmatpush1.msra.mxu0 0.0
          %853 = vmatprep.subr.mxu0 0.0
          %854 = vmatpush1.msra.mxu0 0.0
          %855 = vmatprep.subr.mxu0 0.0
          %856 = vmatpush1.msra.mxu0 0.0
          %857 = vmatprep.subr.mxu0 0.0
          %858 = vmatpush1.msra.mxu0 0.0
          %859 = vmatprep.subr.mxu0 0.0
          %860 = vmatpush1.msra.mxu0 0.0
          %861 = vmatprep.subr.mxu0 0.0
          %862 = vmatpush1.msra.mxu0 0.0
          %863 = vmatprep.subr.mxu0 0.0
          %864 = vmatpush1.msra.mxu0 0.0
          %865 = vmatprep.subr.mxu0 0.0
          %866 = vmatpush1.msra.mxu0 0.0
          %867 = vmatprep.subr.mxu0 0.0
          %868 = vmatpush1.msra.mxu0 0.0
          %869 = vmatprep.subr.mxu0 0.0
          %870 = vmatpush1.msra.mxu0 0.0
          %871 = vmatprep.subr.mxu0 0.0
          %872 = vmatpush1.msra.mxu0 0.0
          %873 = vmatprep.subr.mxu0 0.0
          %874 = vmatpush1.msra.mxu0 0.0
          %875 = vmatprep.subr.mxu0 0.0
          %876 = vmatpush1.msra.mxu0 0.0
          %877 = vmatprep.subr.mxu0 0.0
          %878 = vmatpush1.msra.mxu0 0.0
          %879 = vmatprep.subr.mxu0 0.0
          %880 = vmatpush1.msra.mxu0 0.0
          %881 = vmatprep.subr.mxu0 0.0
          %882 = vmatpush1.msra.mxu0 0.0
          %883 = vmatprep.subr.mxu0 0.0
          %884 = vmatpush1.msra.mxu0 0.0
          %885 = vmatprep.subr.mxu0 0.0
          %886 = vmatpush1.msra.mxu0 0.0
          %887 = vmatprep.subr.mxu0 0.0
          %888 = vmatpush1.msra.mxu0 0.0
          %889 = vmatprep.subr.mxu0 0.0
          %890 = vmatpush1.msra.mxu0 0.0
          %891 = vmatprep.subr.mxu0 0.0
          %892 = vmatpush1.msra.mxu0 0.0
          %893 = vmatprep.subr.mxu0 0.0
          %894 = vmatpush1.msra.mxu0 0.0
          %895 = vmatprep.subr.mxu0 0.0
          %896 = vmatpush1.msra.mxu0 0.0
          %897 = vmatprep.subr.mxu0 0.0
          %898 = vmatpush1.msra.mxu0 0.0
          %899 = vmatprep.mubr.f32.mxu0 0.0
          %900 = vmatmul.mubr.f32.gmra.mrb[0].mxu0 %v833
          %v901 = vpop.f32.mrb[0].mxu0
          %v902 = vadd.f32 0.0, %v901
          %v903 = vpop.f32.mrb[0].mxu0
          %904 = vdwg.mxu0
          %v906 = vrot.slane %v902, 1
          %v908 = vadd.f32 %v902, %v906
          %v909 = vxor.u32 %v908, 2147483648
          %v910 = vmul.f32 %v909, 1.442695
          %v911 = vpow.pop %v910
          %v912 = vadd.f32 %v911, 1.0
          %v913 = vrcp.pop %v912
          %v914 = vmul.f32 1.0, %v913
          %915 = vst [vmem:[%s203] sm:$0x1] %v914
        $region44: #{tpu_custom_call.1} parent=31 // pred_fallthru
          _
        %s916 = sand.u32 %s110, 1
        %s917 = scalar_lea.sflag [#allocation6], %s916
        %s918 = sand.u32 %s110, 1
        %s919 = scalar_lea.vmem [#allocation7], %s918
        // Predicated region
        $region45: #{tpu_custom_call.1} parent=31 // pred_check
          %p920 = pneg %p120
        $region46: #{tpu_custom_call.1} parent=31 // pred_check_branch
          %922 = sbr.rel (%p920) target = $region48
        $region47: #{tpu_custom_call.1} parent=31 // pred_region
          %s924 = ssub.s32 16, 16
          %925 = vsyncadd %s917, %s924
          %s926 = smul.addr %s24, 16
          %s927 = scalar_lea.hbm %s3, %s926
          %s929 = sshll.u32 %s919, 4
          %s930 = int_to_ptr.vmem [resolvable:$true] %s929
          %932 = dma.vmem_to_hbm [thread:$0]  %s930, 16, %s927, %s917
        $region48: #{tpu_custom_call.1} parent=31 // pred_fallthru
          _
      $region32: #{tpu_custom_call.1} parent=5 // pred_fallthru
        _
      %p933 = scmp.le.s32.totalorder 2, %s15
      // Predicated region
      $region49: #{tpu_custom_call.1} parent=5 // pred_check
        %p934 = pneg %p933
      $region50: #{tpu_custom_call.1} parent=5 // pred_check_branch
        %936 = sbr.rel (%p934) target = $region52
      $region51: #{tpu_custom_call.1} parent=5 // pred_region
        %s937 = ssub.s32 %s15, 2
        // Predicated region
        $region53: #{tpu_custom_call.1} parent=51 // pred_check
          %p938 = pneg %p126
        $region54: #{tpu_custom_call.1} parent=51 // pred_check_branch
          %940 = sbr.rel (%p938) target = $region56
        $region55: #{tpu_custom_call.1} parent=51 // pred_region
          %s941 = sand.u32 %s111, 1
          %s942 = scalar_lea.sflag [#allocation6], %s941
          %s943 = sand.u32 %s111, 1
          %s944 = scalar_lea.vmem [#allocation7], %s943
          %945 = dma.done %s942, 16
        $region56: #{tpu_custom_call.1} parent=51 // pred_fallthru
          _
      $region52: #{tpu_custom_call.1} parent=5 // pred_fallthru
        _
    $region6: #{tpu_custom_call.1} parent=1 // loop_footer
      %s19 = sadd.s32 1, %s15
    $region7: #{tpu_custom_call.1} parent=1 // loop_footer_branch
      %14 = sbr.rel target = $region3
    $region8: #{tpu_custom_call.1} parent=1 // loop_exit
      _
    %946 = vsyncpa [#allocation5], 1
    %s947 = scalar_lea.sflag [#allocation5], 1
    %948 = vsyncpa %s947, 1
    %949 = vsyncpa [#allocation6], 1
    %s950 = scalar_lea.sflag [#allocation6], 1
    %951 = vsyncpa %s950, 1

</llo_original>
